<compile_context>
chip_gen: v6e
topology: v6e:2x2x1
jax: 0.10.0
libtpu: 0.0.40
codegen_flags: <defaults>
</compile_context>

<pallas_src>
import functools
import math

import jax
import jax.numpy as jnp
from jax import lax
from jax.experimental import pallas as pl
from jax.experimental.pallas import tpu as pltpu

NEG_INF_BIAS = -1e30  # additive causal bias; scores stay f32 so this is safe


def _pick_tile(total, preferred):
    """Largest multiple-of-8 tile <= preferred that divides `total`, else `total`."""
    if total <= preferred:
        return total
    t = preferred
    while t >= 8:
        if total % t == 0:
            return t
        t -= 8
    return total


# ----------------------------- pass 1: fused QKV projection -----------------------------
def _qkv_proj_kernel(x_ref, wqkv_ref, q_ref, k_ref, v_ref):
    d_out = q_ref.shape[-1]
    qkv = jnp.dot(x_ref[...], wqkv_ref[...], preferred_element_type=jnp.float32)
    q_ref[...] = qkv[:, 0 * d_out:1 * d_out].astype(q_ref.dtype)
    k_ref[...] = qkv[:, 1 * d_out:2 * d_out].astype(k_ref.dtype)
    v_ref[...] = qkv[:, 2 * d_out:3 * d_out].astype(v_ref.dtype)


# ------------------- pass 2: flash attention + fused output projection ------------------
def _flash_mha_kernel(q_ref, k_ref, v_ref, wo_ref, bo_ref, out_ref,
                      m_sc, l_sc, acc_sc, *, num_heads, tq, tkv):
    H = num_heads
    D = q_ref.shape[-1]
    hd = D // H
    cdt = q_ref.dtype

    qi = pl.program_id(1)
    ki = pl.program_id(2)
    n_kv = pl.num_programs(2)

    q_start = qi * tq
    kv_start = ki * tkv

    @pl.when(ki == 0)
    def _init():
        m_sc[...] = jnp.full(m_sc.shape, -jnp.inf, dtype=m_sc.dtype)
        l_sc[...] = jnp.zeros(l_sc.shape, dtype=l_sc.dtype)
        acc_sc[...] = jnp.zeros(acc_sc.shape, dtype=acc_sc.dtype)

    # Skip KV blocks entirely above the causal diagonal (~2x less attention work).
    @pl.when(kv_start <= q_start + tq - 1)
    def _compute():
        # Additive causal bias, built once per (q, kv) block and shared across heads.
        rows = q_start + lax.broadcasted_iota(jnp.int32, (tq, tkv), 0)
        cols = kv_start + lax.broadcasted_iota(jnp.int32, (tq, tkv), 1)
        bias = jnp.where(cols <= rows, 0.0, NEG_INF_BIAS).astype(jnp.float32)

        for h in range(H):                       # unrolled; per-head 2-D MXU dots
            off = h * hd
            q_h = q_ref[:, off:off + hd]         # (tq, hd), pre-scaled by 1/sqrt(hd)
            k_h = k_ref[:, off:off + hd]         # (tkv, hd)
            v_h = v_ref[:, off:off + hd]         # (tkv, hd)

            s = lax.dot_general(q_h, k_h, (((1,), (1,)), ((), ())),
                                preferred_element_type=jnp.float32)   # (tq, tkv) f32
            s = s + bias

            m_prev = m_sc[h]                                          # (tq, 1)
            m_new = jnp.maximum(m_prev, jnp.max(s, axis=-1, keepdims=True))
            alpha = jnp.exp(m_prev - m_new)
            e = jnp.exp(s - m_new)                                    # f32 softmax path

            l_sc[h] = alpha * l_sc[h] + jnp.sum(e, axis=-1, keepdims=True)
            pv = jnp.dot(e.astype(cdt), v_h, preferred_element_type=jnp.float32)
            acc_sc[:, off:off + hd] = alpha * acc_sc[:, off:off + hd] + pv
            m_sc[h] = m_new

    @pl.when(ki == n_kv - 1)
    def _finalize():
        for h in range(H):
            off = h * hd
            inv_l = pl.reciprocal(l_sc[h], approx=True)   # EUP slot, keeps VALU free
            acc_sc[:, off:off + hd] = acc_sc[:, off:off + hd] * inv_l
        ctx = acc_sc[...].astype(cdt)
        out = jnp.dot(ctx, wo_ref[...], preferred_element_type=jnp.float32) + bo_ref[...]
        out_ref[...] = out.astype(out_ref.dtype)


# ----------------------------------- host-side wrapper ----------------------------------
def prepare_params(params, num_heads, compute_dtype=jnp.bfloat16):
    """One-time weight prep: fuse QKV, fold 1/sqrt(hd) into W_q, cast to compute dtype."""
    D = params["wq"].shape[0]
    hd = D // num_heads
    scale = 1.0 / math.sqrt(hd)
    wqkv = jnp.concatenate(
        [params["wq"] * scale, params["wk"], params["wv"]], axis=1).astype(compute_dtype)
    return {
        "wqkv": wqkv,                                       # (D, 3D)
        "wo": params["wo"].astype(compute_dtype),           # (D, D)
        "bo": params["bo"].reshape(1, -1).astype(jnp.float32),  # (1, D)
    }


def multi_head_attention(x, prepared, num_heads, *, q_tile=128, kv_tile=256, proj_tile=256):
    B, T, D = x.shape
    assert D % num_heads == 0
    cdt = prepared["wqkv"].dtype

    rows = B * T
    tr = _pick_tile(rows, proj_tile)
    tq = _pick_tile(T, q_tile)
    tkv = _pick_tile(T, kv_tile)

    # Tiles are a few MiB even at GPT-2 sizes; explicit limit (> v5e's 16 MiB default,
    # comfortably inside v7x's 64 MiB physical VMEM).
    vmem_limit = 32 * 1024 * 1024

    x2d = x.reshape(rows, D).astype(cdt)

    # ---- pass 1: fused QKV projection ----
    q2d, k2d, v2d = pl.pallas_call(
        _qkv_proj_kernel,
        out_shape=(jax.ShapeDtypeStruct((rows, D), cdt),) * 3,
        grid_spec=pltpu.PrefetchScalarGridSpec(
            num_scalar_prefetch=0,
            grid=(rows // tr,),
            in_specs=[
                pl.BlockSpec((tr, D), lambda i: (i, 0)),        # x row tile
                pl.BlockSpec((D, 3 * D), lambda i: (0, 0)),     # fused W_qkv
            ],
            out_specs=[pl.BlockSpec((tr, D), lambda i: (i, 0))] * 3,
        ),
        compiler_params=pltpu.CompilerParams(
            dimension_semantics=("parallel",),
            vmem_limit_bytes=vmem_limit),
    )(x2d, prepared["wqkv"])

    q = q2d.reshape(B, T, D)
    k = k2d.reshape(B, T, D)
    v = v2d.reshape(B, T, D)

    kernel = functools.partial(_flash_mha_kernel, num_heads=num_heads, tq=tq, tkv=tkv)

    # ---- pass 2: flash attention + fused output projection ----
    out = pl.pallas_call(
        kernel,
        out_shape=jax.ShapeDtypeStruct((B, T, D), jnp.float32),
        grid_spec=pltpu.PrefetchScalarGridSpec(
            num_scalar_prefetch=0,
            grid=(B, T // tq, T // tkv),     # kv (reduction) axis last
            in_specs=[
                pl.BlockSpec((pl.Squeezed(), tq, D), lambda b, qi, ki: (b, qi, 0)),   # q
                pl.BlockSpec((pl.Squeezed(), tkv, D), lambda b, qi, ki: (b, ki, 0)),  # k
                pl.BlockSpec((pl.Squeezed(), tkv, D), lambda b, qi, ki: (b, ki, 0)),  # v
                pl.BlockSpec((D, D), lambda b, qi, ki: (0, 0)),                       # W_o
                pl.BlockSpec((1, D), lambda b, qi, ki: (0, 0)),                       # b_o
            ],
            out_specs=pl.BlockSpec((pl.Squeezed(), tq, D), lambda b, qi, ki: (b, qi, 0)),
            scratch_shapes=[
                pltpu.VMEM((num_heads, tq, 1), jnp.float32),   # running max  m
                pltpu.VMEM((num_heads, tq, 1), jnp.float32),   # running sum  l
                pltpu.VMEM((tq, D), jnp.float32),              # output accumulator
            ],
        ),
        compiler_params=pltpu.CompilerParams(
            dimension_semantics=("parallel", "parallel", "arbitrary"),
            vmem_limit_bytes=vmem_limit),
    )(q, k, v, prepared["wo"], prepared["bo"])
    return out


# ------------------------------------ reference & test ----------------------------------
def reference_mha(x, params, num_heads):
    """Plain-JAX reference mirroring the PyTorch forward exactly (f32)."""
    B, T, D = x.shape
    hd = D // num_heads
    q = (x @ params["wq"]).reshape(B, T, num_heads, hd).transpose(0, 2, 1, 3)
    k = (x @ params["wk"]).reshape(B, T, num_heads, hd).transpose(0, 2, 1, 3)
    v = (x @ params["wv"]).reshape(B, T, num_heads, hd).transpose(0, 2, 1, 3)
    scores = jnp.einsum("bhqd,bhkd->bhqk", q, k)
    mask = jnp.triu(jnp.ones((T, T), dtype=bool), k=1)
    scores = jnp.where(mask, -jnp.inf, scores)
    w = jax.nn.softmax(scores / math.sqrt(hd), axis=-1)
    ctx = jnp.einsum("bhqk,bhkd->bhqd", w, v).transpose(0, 2, 1, 3).reshape(B, T, D)
    return ctx @ params["wo"] + params["bo"]


def init_params(key, D):
    ks = jax.random.split(key, 5)
    s = 0.05
    return {
        "wq": s * jax.random.normal(ks[0], (D, D), jnp.float32),
        "wk": s * jax.random.normal(ks[1], (D, D), jnp.float32),
        "wv": s * jax.random.normal(ks[2], (D, D), jnp.float32),
        "wo": s * jax.random.normal(ks[3], (D, D), jnp.float32),
        "bo": s * jax.random.normal(ks[4], (1, D), jnp.float32),
    }


if __name__ == "__main__":
    # config: d_in = d_out = 32, context_length = 8, n_heads = 4, dropout = 0.0, qkv_bias = False
    B, T, D, H = 2, 8, 32, 4

    key = jax.random.PRNGKey(0)
    kx, kp = jax.random.split(key)
    x = jax.random.normal(kx, (B, T, D), jnp.float32)
    params = init_params(kp, D)

    ref = reference_mha(x, params, num_heads=H)

    # f32 MXU-input path (near bit-faithful; approx reciprocal adds ~1e-3 rel on softmax)
    prep_f32 = prepare_params(params, H, compute_dtype=jnp.float32)
    out = jax.block_until_ready(multi_head_attention(x, prep_f32, H))
    assert out.shape == (B, T, D)
    assert jnp.allclose(out, ref, atol=2e-3, rtol=2e-3), "f32 kernel mismatch vs reference"

    # bf16 MXU-input path (default for production; f32 accumulation & softmax)
    prep_bf16 = prepare_params(params, H, compute_dtype=jnp.bfloat16)
    out_bf16 = jax.block_until_ready(multi_head_attention(x, prep_bf16, H))
    assert jnp.allclose(out_bf16, ref, atol=5e-2, rtol=5e-2), "bf16 kernel mismatch vs reference"

    print("KERNEL_OK")
</pallas_src>

<mosaic_0001>
module attributes {stable_mosaic.version = 11 : i64} {
  func.func @_qkv_proj_kernel(%arg0: i32, %arg1: memref<16x32xf32, #tpu.memory_space<vmem>>, %arg2: memref<32x96xf32, #tpu.memory_space<vmem>>, %arg3: memref<16x32xf32, #tpu.memory_space<vmem>>, %arg4: memref<16x32xf32, #tpu.memory_space<vmem>>, %arg5: memref<16x32xf32, #tpu.memory_space<vmem>>) attributes {dimension_semantics = [#tpu.dimension_semantics<parallel>], iteration_bounds = array<i64: 1>, scalar_prefetch = 0 : i64, scratch_operands = 0 : i64, tpu.core_type = #tpu.core_type<tc>, window_params = [{transform_indices = @transform_0, window_bounds = array<i64: 16, 32>}, {pipeline_mode = #tpu.pipeline_mode<synchronous>, transform_indices = @transform_1, window_bounds = array<i64: 32, 96>}, {transform_indices = @transform_2, window_bounds = array<i64: 16, 32>}, {transform_indices = @transform_3, window_bounds = array<i64: 16, 32>}, {transform_indices = @transform_4, window_bounds = array<i64: 16, 32>}]} {
    %c0 = arith.constant 0 : index
    %c0_0 = arith.constant 0 : index
    %0 = vector.load %arg1[%c0, %c0_0] : memref<16x32xf32, #tpu.memory_space<vmem>>, vector<16x32xf32>
    %c0_1 = arith.constant 0 : index
    %c0_2 = arith.constant 0 : index
    %1 = vector.load %arg2[%c0_1, %c0_2] : memref<32x96xf32, #tpu.memory_space<vmem>>, vector<32x96xf32>
    %cst = arith.constant dense<0.000000e+00> : vector<16x96xf32>
    %2 = tpu.matmul %0, %1, %cst {dimension_numbers = #tpu.dot_dimension_numbers<[1], [0], [0], [1], [0, 0, 1, 1], [], []>} : vector<16x32xf32>, vector<32x96xf32>, vector<16x96xf32> -> vector<16x96xf32>
    %3 = vector.extract_strided_slice %2 {offsets = [0, 0], sizes = [16, 32], strides = [1, 1]} : vector<16x96xf32> to vector<16x32xf32>
    %c0_3 = arith.constant 0 : index
    %c0_4 = arith.constant 0 : index
    %4 = vector.load %arg3[%c0_3, %c0_4] : memref<16x32xf32, #tpu.memory_space<vmem>>, vector<16x32xf32>
    tpu.vector_store %arg3[%c0_3, %c0_4], %3 {strides = array<i32>} : memref<16x32xf32, #tpu.memory_space<vmem>>, vector<16x32xf32>,
    %5 = vector.extract_strided_slice %2 {offsets = [0, 32], sizes = [16, 32], strides = [1, 1]} : vector<16x96xf32> to vector<16x32xf32>
    %c0_5 = arith.constant 0 : index
    %c0_6 = arith.constant 0 : index
    %6 = vector.load %arg4[%c0_5, %c0_6] : memref<16x32xf32, #tpu.memory_space<vmem>>, vector<16x32xf32>
    tpu.vector_store %arg4[%c0_5, %c0_6], %5 {strides = array<i32>} : memref<16x32xf32, #tpu.memory_space<vmem>>, vector<16x32xf32>,
    %7 = vector.extract_strided_slice %2 {offsets = [0, 64], sizes = [16, 32], strides = [1, 1]} : vector<16x96xf32> to vector<16x32xf32>
    %c0_7 = arith.constant 0 : index
    %c0_8 = arith.constant 0 : index
    %8 = vector.load %arg5[%c0_7, %c0_8] : memref<16x32xf32, #tpu.memory_space<vmem>>, vector<16x32xf32>
    tpu.vector_store %arg5[%c0_7, %c0_8], %7 {strides = array<i32>} : memref<16x32xf32, #tpu.memory_space<vmem>>, vector<16x32xf32>,
    return
  }
  func.func @transform_0(%arg0: i32) -> (i32, i32) {
    %c0_i32 = arith.constant 0 : i32
    %c0_i32_0 = arith.constant 0 : i32
    return %arg0, %c0_i32 : i32, i32
  }
  func.func @transform_1(%arg0: i32) -> (i32, i32) {
    %c0_i32 = arith.constant 0 : i32
    %c0_i32_0 = arith.constant 0 : i32
    %c0_i32_1 = arith.constant 0 : i32
    return %c0_i32, %c0_i32_0 : i32, i32
  }
  func.func @transform_2(%arg0: i32) -> (i32, i32) {
    %c0_i32 = arith.constant 0 : i32
    %c0_i32_0 = arith.constant 0 : i32
    return %arg0, %c0_i32 : i32, i32
  }
  func.func @transform_3(%arg0: i32) -> (i32, i32) {
    %c0_i32 = arith.constant 0 : i32
    %c0_i32_0 = arith.constant 0 : i32
    return %arg0, %c0_i32 : i32, i32
  }
  func.func @transform_4(%arg0: i32) -> (i32, i32) {
    %c0_i32 = arith.constant 0 : i32
    %c0_i32_0 = arith.constant 0 : i32
    return %arg0, %c0_i32 : i32, i32
  }
}

</mosaic_0001>

<llo_original>
// kernel: tpu_custom_call.1
$region0: #{tpu_custom_call.1}
  #allocation0 [shape = 'u32[]', space=smem, size = 0x4, offset = 0x4, fixed_abs, tag = 'smem constant byte address 0x4 - core index']
  #allocation1 [shape = 'u32[144,128]{1,0:T(1,128)}', space=vmem, size = 0x12000, scoped, tag = 'internal scratch']
  %s0 = inlined_call_operand.hbm [shape: f32[16,32], index: 0, kind: input, shape index: {}]
  %s1 = inlined_call_operand.hbm [shape: f32[32,96], index: 1, kind: input, shape index: {}]
  %s2 = inlined_call_operand.hbm [shape: f32[16,32], index: 2, kind: output, shape index: {0}]
  %s3 = inlined_call_operand.hbm [shape: f32[16,32], index: 3, kind: output, shape index: {1}]
  %s4 = inlined_call_operand.hbm [shape: f32[16,32], index: 4, kind: output, shape index: {2}]
  %5 = xla_tuple %s2, %s3, %s4
  %s6 = sld [smem:[#allocation0]]
  $region42: #{tpu_custom_call.1} parent=0
    _
  %s8 = ssub.s32 1, %s6
  %s9 = scalar_select 0, %s8, %s6
  $region1: #{tpu_custom_call.1} parent=0
    #allocation2 [shape = 'u8[8192]{0}', space=vmem, size = 0x2000, scoped, tag = 'input window, operand 0, single buffered']
    #allocation3 [shape = 's32[1]{0}', space=sflag, size = 0x4, scoped, tag = 'scoped memory for tpu_custom_call.1']
    #allocation4 [shape = 's32[1]{0}', space=sflag, size = 0x4, scoped, tag = 'scoped memory for tpu_custom_call.1']
    #allocation5 [shape = 'u8[16384]{0}', space=vmem, size = 0x4000, scoped, tag = 'input window, operand 1, single buffered']
    #allocation6 [shape = 's32[1]{0}', space=sflag, size = 0x4, scoped, tag = 'scoped memory for tpu_custom_call.1']
    #allocation7 [shape = 'u8[8192]{0}', space=vmem, size = 0x2000, scoped, tag = 'output window, operand 0, single buffered']
    #allocation8 [shape = 'u8[8192]{0}', space=vmem, size = 0x2000, scoped, tag = 'output window, operand 1, single buffered']
    #allocation9 [shape = 's32[1]{0}', space=sflag, size = 0x4, scoped, tag = 'scoped memory for tpu_custom_call.1']
    #allocation10 [shape = 'u8[8192]{0}', space=vmem, size = 0x2000, scoped, tag = 'output window, operand 2, single buffered']
    %10 = vsyncpa [#allocation3], 0
    %11 = vsyncpa [#allocation6], 0
    %12 = vsyncpa [#allocation4], 0
    %13 = vsyncpa [#allocation9], 0
    // Predicated region
    $region2: #{tpu_custom_call.1} parent=1 // pred_check
      _
    $region3: #{tpu_custom_call.1} parent=1 // pred_check_branch
      %15 = sbr.rel (0) target = $region5
    $region4: #{tpu_custom_call.1} parent=1 // pred_region
      %s17 = ssub.s32 256, 256
      %18 = vsyncadd [#allocation3], %s17
      %s19 = sshll.u32 [#allocation2], 4
      %s20 = int_to_ptr.vmem [resolvable:$true] %s19
      %25 = dma.hbm_to_vmem [thread:$0]  %s0, 256, %s20, [#allocation3], 128, 128, 8
    $region5: #{tpu_custom_call.1} parent=1 // pred_fallthru
      _
    // Predicated region
    $region6: #{tpu_custom_call.1} parent=1 // pred_check
      _
    $region7: #{tpu_custom_call.1} parent=1 // pred_check_branch
      %27 = sbr.rel (0) target = $region9
    $region8: #{tpu_custom_call.1} parent=1 // pred_region
      %s29 = ssub.s32 512, 512
      %30 = vsyncadd [#allocation6], %s29
      %s31 = sshll.u32 [#allocation5], 4
      %s32 = int_to_ptr.vmem [resolvable:$true] %s31
      %37 = dma.hbm_to_vmem [thread:$0]  %s1, 512, %s32, [#allocation6], 128, 128, 8
    $region9: #{tpu_custom_call.1} parent=1 // pred_fallthru
      _
    // Predicated region
    $region10: #{tpu_custom_call.1} parent=1 // pred_check
      _
    $region11: #{tpu_custom_call.1} parent=1 // pred_check_branch
      %39 = sbr.rel (0) target = $region13
    $region12: #{tpu_custom_call.1} parent=1 // pred_region
      %40 = dma.done [#allocation3], 256
    $region13: #{tpu_custom_call.1} parent=1 // pred_fallthru
      _
    // Predicated region
    $region14: #{tpu_custom_call.1} parent=1 // pred_check
      _
    $region15: #{tpu_custom_call.1} parent=1 // pred_check_branch
      %42 = sbr.rel (0) target = $region17
    $region16: #{tpu_custom_call.1} parent=1 // pred_region
      %43 = dma.done [#allocation6], 512
    $region17: #{tpu_custom_call.1} parent=1 // pred_fallthru
      _
    %v44 = vld [vmem:[#allocation2] sm:$0xff]
    %v45 = vld [vmem:[#allocation2 + $0x8] sm:$0xff]
    %v46 = vld [vmem:[#allocation5] sm:$0xff]
    %v47 = vld [vmem:[#allocation5 + $0x8] sm:$0xff]
    %v48 = vld [vmem:[#allocation5 + $0x10] sm:$0xff]
    %v49 = vld [vmem:[#allocation5 + $0x18] sm:$0xff]
    %vm50 = vcmask 261120
    %v52 = vsel %vm50, %v44, 0
    %v55 = vsel %vm50, %v45, 0
    %57 = vmatprep.subr.mxu0 0.0
    %58 = vmatpush1.msra.mxu0 0.0
    %59 = vmatprep.subr.mxu0 0.0
    %60 = vmatpush1.msra.mxu0 0.0
    %61 = vmatprep.subr.mxu0 0.0
    %62 = vmatpush1.msra.mxu0 0.0
    %63 = vmatprep.subr.mxu0 0.0
    %64 = vmatpush1.msra.mxu0 0.0
    %65 = vmatprep.subr.mxu0 0.0
    %66 = vmatpush1.msra.mxu0 0.0
    %67 = vmatprep.subr.mxu0 0.0
    %68 = vmatpush1.msra.mxu0 0.0
    %69 = vmatprep.subr.mxu0 0.0
    %70 = vmatpush1.msra.mxu0 0.0
    %71 = vmatprep.subr.mxu0 0.0
    %72 = vmatpush1.msra.mxu0 0.0
    %73 = vmatprep.subr.mxu0 0.0
    %74 = vmatpush1.msra.mxu0 0.0
    %75 = vmatprep.subr.mxu0 0.0
    %76 = vmatpush1.msra.mxu0 0.0
    %77 = vmatprep.subr.mxu0 0.0
    %78 = vmatpush1.msra.mxu0 0.0
    %79 = vmatprep.subr.mxu0 0.0
    %80 = vmatpush1.msra.mxu0 0.0
    %81 = vmatprep.subr.mxu0 0.0
    %82 = vmatpush1.msra.mxu0 %v49
    %83 = vmatprep.subr.mxu0 0.0
    %84 = vmatpush1.msra.mxu0 %v48
    %85 = vmatprep.subr.mxu0 0.0
    %86 = vmatpush1.msra.mxu0 %v47
    %87 = vmatprep.subr.mxu0 0.0
    %88 = vmatpush1.msra.mxu0 %v46
    %89 = vmatprep.subr.mxu0 0.0
    %90 = vmatpush2.msra.mxu0 0.0
    %91 = vmatprep.subr.mxu0 0.0
    %92 = vmatpush2.msra.mxu0 0.0
    %93 = vmatprep.subr.mxu0 0.0
    %94 = vmatpush2.msra.mxu0 0.0
    %95 = vmatprep.subr.mxu0 0.0
    %96 = vmatpush2.msra.mxu0 0.0
    %97 = vmatprep.subr.mxu0 0.0
    %98 = vmatpush2.msra.mxu0 0.0
    %99 = vmatprep.subr.mxu0 0.0
    %100 = vmatpush2.msra.mxu0 0.0
    %101 = vmatprep.subr.mxu0 0.0
    %102 = vmatpush2.msra.mxu0 0.0
    %103 = vmatprep.subr.mxu0 0.0
    %104 = vmatpush2.msra.mxu0 0.0
    %105 = vmatprep.subr.mxu0 0.0
    %106 = vmatpush2.msra.mxu0 0.0
    %107 = vmatprep.subr.mxu0 0.0
    %108 = vmatpush2.msra.mxu0 0.0
    %109 = vmatprep.subr.mxu0 0.0
    %110 = vmatpush2.msra.mxu0 0.0
    %111 = vmatprep.subr.mxu0 0.0
    %112 = vmatpush2.msra.mxu0 0.0
    %113 = vmatprep.subr.mxu0 0.0
    %114 = vmatpush2.msra.mxu0 0.0
    %115 = vmatprep.subr.mxu0 0.0
    %116 = vmatpush2.msra.mxu0 0.0
    %117 = vmatprep.subr.mxu0 0.0
    %118 = vmatpush2.msra.mxu0 0.0
    %119 = vmatprep.subr.mxu0 0.0
    %120 = vmatpush2.msra.mxu0 0.0
    %121 = vmatprep.mubr.f32.mxu0 0.0
    %122 = vmatmul.mubr.f32.gmra.mxu0 %v52
    %v123 = vpop.f32.mrf.mxu0
    %v124 = vadd.f32 0.0, %v123
    %v125 = vpop.f32.mrf.mxu0
    %126 = vmatprep.mubr.f32.mxu0 0.0
    %127 = vmatmul.mubr.f32.gmra.mxu0 %v55
    %v128 = vpop.f32.mrf.mxu0
    %v129 = vadd.f32 0.0, %v128
    %v130 = vpop.f32.mrf.mxu0
    %131 = vdwg.mxu0
    %132 = vst.msk [vmem:[#allocation7] sm:$0xff] %vm50, %v124
    %133 = vst.msk [vmem:[#allocation7 + $0x8] sm:$0xff] %vm50, %v129
    %136 = vrot.lane.b32.xlu0 %v124, 96
    %v137 = vpop.permute.xlu0 %136
    %138 = vrot.lane.b32.xlu0 %v129, 96
    %v139 = vpop.permute.xlu0 %138
    %142 = vst.msk [vmem:[#allocation8] sm:$0xff] %vm50, %v137
    %143 = vst.msk [vmem:[#allocation8 + $0x8] sm:$0xff] %vm50, %v139
    %144 = vrot.lane.b32.xlu0 %v124, 64
    %v145 = vpop.permute.xlu0 %144
    %146 = vrot.lane.b32.xlu0 %v129, 64
    %v147 = vpop.permute.xlu0 %146
    %150 = vst.msk [vmem:[#allocation10] sm:$0xff] %vm50, %v145
    %151 = vst.msk [vmem:[#allocation10 + $0x8] sm:$0xff] %vm50, %v147
    // Predicated region
    $region18: #{tpu_custom_call.1} parent=1 // pred_check
      _
    $region19: #{tpu_custom_call.1} parent=1 // pred_check_branch
      %153 = sbr.rel (0) target = $region21
    $region20: #{tpu_custom_call.1} parent=1 // pred_region
      %s155 = ssub.s32 256, 256
      %156 = vsyncadd [#allocation4], %s155
      %s157 = sshll.u32 [#allocation7], 4
      %s158 = int_to_ptr.vmem [resolvable:$true] %s157
      %163 = dma.vmem_to_hbm [thread:$0]  %s158, 256, %s2, [#allocation4], 128, 128, 8
    $region21: #{tpu_custom_call.1} parent=1 // pred_fallthru
      _
    // Predicated region
    $region22: #{tpu_custom_call.1} parent=1 // pred_check
      _
    $region23: #{tpu_custom_call.1} parent=1 // pred_check_branch
      %165 = sbr.rel (0) target = $region25
    $region24: #{tpu_custom_call.1} parent=1 // pred_region
      %s167 = ssub.s32 256, 256
      %168 = vsyncadd [#allocation9], %s167
      %s169 = sshll.u32 [#allocation8], 4
      %s170 = int_to_ptr.vmem [resolvable:$true] %s169
      %175 = dma.vmem_to_hbm [thread:$0]  %s170, 256, %s3, [#allocation9], 128, 128, 8
    $region25: #{tpu_custom_call.1} parent=1 // pred_fallthru
      _
    // Predicated region
    $region26: #{tpu_custom_call.1} parent=1 // pred_check
      _
    $region27: #{tpu_custom_call.1} parent=1 // pred_check_branch
      %177 = sbr.rel (0) target = $region29
    $region28: #{tpu_custom_call.1} parent=1 // pred_region
      %s179 = ssub.s32 256, 256
      %180 = vsyncadd [#allocation9], %s179
      %s181 = sshll.u32 [#allocation10], 4
      %s182 = int_to_ptr.vmem [resolvable:$true] %s181
      %187 = dma.vmem_to_hbm [thread:$0]  %s182, 256, %s4, [#allocation9], 128, 128, 8
    $region29: #{tpu_custom_call.1} parent=1 // pred_fallthru
      _
    // Predicated region
    $region30: #{tpu_custom_call.1} parent=1 // pred_check
      _
    $region31: #{tpu_custom_call.1} parent=1 // pred_check_branch
      %189 = sbr.rel (0) target = $region33
    $region32: #{tpu_custom_call.1} parent=1 // pred_region
      %190 = dma.done [#allocation4], 256
    $region33: #{tpu_custom_call.1} parent=1 // pred_fallthru
      _
    // Predicated region
    $region34: #{tpu_custom_call.1} parent=1 // pred_check
      _
    $region35: #{tpu_custom_call.1} parent=1 // pred_check_branch
      %192 = sbr.rel (0) target = $region37
    $region36: #{tpu_custom_call.1} parent=1 // pred_region
      %193 = dma.done [#allocation9], 256
    $region37: #{tpu_custom_call.1} parent=1 // pred_fallthru
      _
    // Predicated region
    $region38: #{tpu_custom_call.1} parent=1 // pred_check
      _
    $region39: #{tpu_custom_call.1} parent=1 // pred_check_branch
      %195 = sbr.rel (0) target = $region41
    $region40: #{tpu_custom_call.1} parent=1 // pred_region
      %196 = dma.done [#allocation9], 256
    $region41: #{tpu_custom_call.1} parent=1 // pred_fallthru
      _
    %197 = vsyncpa [#allocation3], 1
    %198 = vsyncpa [#allocation6], 1
    %199 = vsyncpa [#allocation4], 1
    %200 = vsyncpa [#allocation9], 1

</llo_original>
